<compile_context>
chip_gen: v7x
topology: tpu7x:2x2x1
jax: 0.10.0
libtpu: 0.0.40
codegen_flags: <defaults>
</compile_context>

<pallas_src>
import functools

import jax
import jax.numpy as jnp
from jax.experimental import pallas as pl
from jax.experimental.pallas import tpu as pltpu


def qnet_kernel(xt_ref, w1_ref, b1_ref, w2_ref, b2_ref, o_ref):
    # h = relu(W1 @ x^T + b1): bf16 MXU matmul, f32 accumulation, f32 epilogue.
    h = jnp.dot(w1_ref[...], xt_ref[...], preferred_element_type=jnp.float32)
    h = jnp.maximum(h + b1_ref[...], 0.0)                       # (H, TB) + (H, 1)
    # out^T = W2 @ h + b2 (intentional bf16 re-quantization of activations for MXU).
    out = jnp.dot(w2_ref[...], h.astype(jnp.bfloat16),
                  preferred_element_type=jnp.float32)
    o_ref[...] = (out + b2_ref[...]).astype(o_ref.dtype)        # lane-dense (O, TB)


def _num_tensorcores():
    """Best-effort chip query: 2 TensorCores on v7x, 1 on v5e/v6e."""
    try:
        kind = jax.devices()[0].device_kind.lower()
        if "v7" in kind:
            return 2
    except Exception:
        pass
    return 1


def prepare_params(w1, b1, w2, b2):
    """One-time parameter prep, hoisted out of the per-call forward path.

    w1: (H, I), b1: (H,), w2: (O, H), b2: (O,)  (PyTorch nn.Linear convention).
    Returns ready-to-use kernel operands: bf16 weights, f32 column biases.
    """
    w1_bf = jnp.asarray(w1, jnp.bfloat16)                        # (H, I)
    w2_bf = jnp.asarray(w2, jnp.bfloat16)                        # (O, H)
    b1_col = jnp.asarray(b1, jnp.float32).reshape(-1, 1)         # (H, 1)
    b2_col = jnp.asarray(b2, jnp.float32).reshape(-1, 1)         # (O, 1)
    return w1_bf, b1_col, w2_bf, b2_col


@functools.partial(jax.jit, static_argnames=("block_b",))
def linear_qnet_forward(x, w1_bf, b1_col, w2_bf, b2_col, *, block_b=None):
    """x: (B, I) f32 -> (B, O) f32. Params must come from prepare_params()."""
    B, I = x.shape
    H = w1_bf.shape[0]
    O = w2_bf.shape[0]

    # Batch block size: one block per TensorCore by default. When the batch is
    # split, the lane-axis block must be a multiple of 128.
    if block_b is None:
        n_target = _num_tensorcores()
    else:
        n_target = max(1, -(-B // int(block_b)))
    tb = -(-B // n_target)
    if n_target == 1 or tb >= B:
        tb, n_blocks = B, 1
    else:
        tb = ((tb + 127) // 128) * 128
        if tb >= B:
            tb, n_blocks = B, 1
        else:
            n_blocks = -(-B // tb)
    B_pad = tb * n_blocks

    # Put batch on the lane axis (transpose + bf16 cast fuse into one tiny op).
    xt = jnp.transpose(x).astype(jnp.bfloat16)                   # (I, B)
    if B_pad != B:
        xt = jnp.pad(xt, ((0, 0), (0, B_pad - B)))               # zero tail columns

    out_t = pl.pallas_call(
        qnet_kernel,
        out_shape=jax.ShapeDtypeStruct((O, B_pad), jnp.float32),
        grid_spec=pl.GridSpec(
            grid=(n_blocks,),
            in_specs=[
                pl.BlockSpec((I, tb), lambda i: (0, i)),         # x^T: tiled over batch lanes
                pl.BlockSpec((H, I), lambda i: (0, 0)),          # W1: VMEM-resident
                pl.BlockSpec((H, 1), lambda i: (0, 0)),          # b1: VMEM-resident
                pl.BlockSpec((O, H), lambda i: (0, 0)),          # W2: VMEM-resident
                pl.BlockSpec((O, 1), lambda i: (0, 0)),          # b2: VMEM-resident
            ],
            out_specs=pl.BlockSpec((O, tb), lambda i: (0, i)),
        ),
        compiler_params=pltpu.CompilerParams(
            dimension_semantics=("parallel",)),                  # shard blocks across TCs
    )(xt, w1_bf, b1_col, w2_bf, b2_col)

    return jnp.transpose(out_t[:, :B])                           # (B, O) f32


def init_linear_params(key, in_features, out_features, dtype=jnp.float32):
    """Matches PyTorch nn.Linear init: U(-1/sqrt(fan_in), 1/sqrt(fan_in)).
    Returns weight (out, in) and bias (out,) — PyTorch convention."""
    kw, kb = jax.random.split(key)
    bound = 1.0 / (in_features ** 0.5)
    w = jax.random.uniform(kw, (out_features, in_features), dtype,
                           minval=-bound, maxval=bound)
    b = jax.random.uniform(kb, (out_features,), dtype,
                           minval=-bound, maxval=bound)
    return w, b


# TODO(synk): Linear_QNet.save() (torch.save / filesystem I/O) has no kernel equivalent.

if __name__ == "__main__":
    # Small feature dims consistent with the module; batch sized so the lane-axis
    # batch split (2 x 256 on a dual-TC chip) is exercised cleanly.
    batch, input_size, hidden_size, output_size = 512, 16, 32, 8

    key = jax.random.PRNGKey(0)
    kx, k1, k2 = jax.random.split(key, 3)

    x = jax.random.normal(kx, (batch, input_size), jnp.float32)
    w1, b1 = init_linear_params(k1, input_size, hidden_size)     # (H, I), (H,)
    w2, b2 = init_linear_params(k2, hidden_size, output_size)    # (O, H), (O,)

    # One-time parameter prep (outside the hot forward path).
    params = prepare_params(w1, b1, w2, b2)
    params = jax.block_until_ready(params)

    out = linear_qnet_forward(x, *params)
    out = jax.block_until_ready(out)

    # Reference 1: mirrors the kernel's bf16-operand / f32-accumulation path.
    xr = x.astype(jnp.bfloat16).astype(jnp.float32)
    w1r = w1.astype(jnp.bfloat16).astype(jnp.float32)
    w2r = w2.astype(jnp.bfloat16).astype(jnp.float32)
    hr = jnp.maximum(
        jnp.dot(xr, w1r.T, precision=jax.lax.Precision.HIGHEST) + b1, 0.0)
    hr = hr.astype(jnp.bfloat16).astype(jnp.float32)
    ref = jnp.dot(hr, w2r.T, precision=jax.lax.Precision.HIGHEST) + b2

    # Reference 2: the exact f32 PyTorch forward (loose tolerance for bf16 MXU ops).
    ref_f32 = jnp.maximum(
        jnp.dot(x, w1.T, precision=jax.lax.Precision.HIGHEST) + b1, 0.0)
    ref_f32 = jnp.dot(ref_f32, w2.T, precision=jax.lax.Precision.HIGHEST) + b2

    assert out.shape == (batch, output_size)
    assert out.dtype == jnp.float32
    assert jnp.allclose(out, ref, atol=2e-3, rtol=2e-3)
    assert jnp.allclose(out, ref_f32, atol=1e-1, rtol=1e-1)

    print("KERNEL_OK")
</pallas_src>

<mosaic_0001>
module attributes {stable_mosaic.version = 11 : i64} {
  func.func @qnet_kernel(%arg0: i32, %arg1: memref<16x512xbf16, #tpu.memory_space<vmem>>, %arg2: memref<32x16xbf16, #tpu.memory_space<vmem>>, %arg3: memref<32x1xf32, #tpu.memory_space<vmem>>, %arg4: memref<8x32xbf16, #tpu.memory_space<vmem>>, %arg5: memref<8x1xf32, #tpu.memory_space<vmem>>, %arg6: memref<8x512xf32, #tpu.memory_space<vmem>>) attributes {dimension_semantics = [#tpu.dimension_semantics<parallel>], iteration_bounds = array<i64: 1>, scalar_prefetch = 0 : i64, scratch_operands = 0 : i64, tpu.core_type = #tpu.core_type<tc>, window_params = [{transform_indices = @transform_0, window_bounds = array<i64: 16, 512>}, {pipeline_mode = #tpu.pipeline_mode<synchronous>, transform_indices = @transform_1, window_bounds = array<i64: 32, 16>}, {pipeline_mode = #tpu.pipeline_mode<synchronous>, transform_indices = @transform_2, window_bounds = array<i64: 32, 1>}, {pipeline_mode = #tpu.pipeline_mode<synchronous>, transform_indices = @transform_3, window_bounds = array<i64: 8, 32>}, {pipeline_mode = #tpu.pipeline_mode<synchronous>, transform_indices = @transform_4, window_bounds = array<i64: 8, 1>}, {transform_indices = @transform_5, window_bounds = array<i64: 8, 512>}]} {
    %c0 = arith.constant 0 : index
    %c0_0 = arith.constant 0 : index
    %0 = vector.load %arg2[%c0, %c0_0] : memref<32x16xbf16, #tpu.memory_space<vmem>>, vector<32x16xbf16>
    %c0_1 = arith.constant 0 : index
    %c0_2 = arith.constant 0 : index
    %1 = vector.load %arg1[%c0_1, %c0_2] : memref<16x512xbf16, #tpu.memory_space<vmem>>, vector<16x512xbf16>
    %cst = arith.constant dense<0.000000e+00> : vector<32x512xf32>
    %2 = tpu.matmul %0, %1, %cst {dimension_numbers = #tpu.dot_dimension_numbers<[1], [0], [0], [1], [0, 0, 1, 1], [], []>} : vector<32x16xbf16>, vector<16x512xbf16>, vector<32x512xf32> -> vector<32x512xf32>
    %c0_3 = arith.constant 0 : index
    %c0_4 = arith.constant 0 : index
    %3 = vector.load %arg3[%c0_3, %c0_4] : memref<32x1xf32, #tpu.memory_space<vmem>>, vector<32x1xf32>
    %4 = vector.broadcast %3 : vector<32x1xf32> to vector<32x512xf32>
    %5 = arith.addf %2, %4 : vector<32x512xf32>
    %cst_5 = arith.constant 0.000000e+00 : f32
    %6 = vector.broadcast %cst_5 : f32 to vector<32x512xf32>
    %7 = arith.maximumf %5, %6 : vector<32x512xf32>
    %c0_6 = arith.constant 0 : index
    %c0_7 = arith.constant 0 : index
    %8 = vector.load %arg4[%c0_6, %c0_7] : memref<8x32xbf16, #tpu.memory_space<vmem>>, vector<8x32xbf16>
    %9 = arith.truncf %7 : vector<32x512xf32> to vector<32x512xbf16>
    %cst_8 = arith.constant dense<0.000000e+00> : vector<8x512xf32>
    %10 = tpu.matmul %8, %9, %cst_8 {dimension_numbers = #tpu.dot_dimension_numbers<[1], [0], [0], [1], [0, 0, 1, 1], [], []>} : vector<8x32xbf16>, vector<32x512xbf16>, vector<8x512xf32> -> vector<8x512xf32>
    %c0_9 = arith.constant 0 : index
    %c0_10 = arith.constant 0 : index
    %11 = vector.load %arg5[%c0_9, %c0_10] : memref<8x1xf32, #tpu.memory_space<vmem>>, vector<8x1xf32>
    %12 = vector.broadcast %11 : vector<8x1xf32> to vector<8x512xf32>
    %13 = arith.addf %10, %12 : vector<8x512xf32>
    %c0_11 = arith.constant 0 : index
    %c0_12 = arith.constant 0 : index
    %14 = vector.load %arg6[%c0_11, %c0_12] : memref<8x512xf32, #tpu.memory_space<vmem>>, vector<8x512xf32>
    tpu.vector_store %arg6[%c0_11, %c0_12], %13 {strides = array<i32>} : memref<8x512xf32, #tpu.memory_space<vmem>>, vector<8x512xf32>,
    return
  }
  func.func @transform_0(%arg0: i32) -> (i32, i32) {
    %c0_i32 = arith.constant 0 : i32
    %c0_i32_0 = arith.constant 0 : i32
    return %c0_i32, %arg0 : i32, i32
  }
  func.func @transform_1(%arg0: i32) -> (i32, i32) {
    %c0_i32 = arith.constant 0 : i32
    %c0_i32_0 = arith.constant 0 : i32
    %c0_i32_1 = arith.constant 0 : i32
    return %c0_i32, %c0_i32_0 : i32, i32
  }
  func.func @transform_2(%arg0: i32) -> (i32, i32) {
    %c0_i32 = arith.constant 0 : i32
    %c0_i32_0 = arith.constant 0 : i32
    %c0_i32_1 = arith.constant 0 : i32
    return %c0_i32, %c0_i32_0 : i32, i32
  }
  func.func @transform_3(%arg0: i32) -> (i32, i32) {
    %c0_i32 = arith.constant 0 : i32
    %c0_i32_0 = arith.constant 0 : i32
    %c0_i32_1 = arith.constant 0 : i32
    return %c0_i32, %c0_i32_0 : i32, i32
  }
  func.func @transform_4(%arg0: i32) -> (i32, i32) {
    %c0_i32 = arith.constant 0 : i32
    %c0_i32_0 = arith.constant 0 : i32
    %c0_i32_1 = arith.constant 0 : i32
    return %c0_i32, %c0_i32_0 : i32, i32
  }
  func.func @transform_5(%arg0: i32) -> (i32, i32) {
    %c0_i32 = arith.constant 0 : i32
    %c0_i32_0 = arith.constant 0 : i32
    return %c0_i32, %arg0 : i32, i32
  }
}

</mosaic_0001>

<llo_original>
// kernel: linear_qnet_forward.1
$region0: #{linear_qnet_forward.1}
  #allocation0 [shape = 'u32[]', space=smem, size = 0x4, offset = 0x4, fixed_abs, tag = 'smem constant byte address 0x4 - core index']
  #allocation1 [shape = 'u32[144,128]{1,0:T(1,128)}', space=vmem, size = 0x12000, scoped, tag = 'internal scratch']
  %s0 = inlined_call_operand.vmem [shape: bf16[16,512], index: 0, kind: input, shape index: {}]
  %s1 = inlined_call_operand.vmem [shape: bf16[32,16], index: 1, kind: input, shape index: {}]
  %s2 = inlined_call_operand.vmem [shape: f32[32,1], index: 2, kind: input, shape index: {}]
  %s3 = inlined_call_operand.vmem [shape: bf16[8,32], index: 3, kind: input, shape index: {}]
  %s4 = inlined_call_operand.vmem [shape: f32[8,1], index: 4, kind: input, shape index: {}]
  %s5 = inlined_call_operand.hbm [shape: f32[8,512], index: 5, kind: output, shape index: {}]
  %s6 = sld [smem:[#allocation0]]
  $region30: #{linear_qnet_forward.1} parent=0
    _
  %s8 = ssub.s32 1, %s6
  %s9 = scalar_select 0, %s8, %s6
  $region1: #{linear_qnet_forward.1} parent=0
    #allocation2 [shape = 'u8[16384]{0}', space=vmem, size = 0x4000, scoped, tag = 'output window, operand 0, single buffered']
    #allocation3 [shape = 's32[1]{0}', space=sflag, size = 0x4, scoped, tag = 'scoped memory for linear_qnet_forward.1']
    %10 = vsyncpa [#allocation3], 0
    // Predicated region
    $region2: #{linear_qnet_forward.1} parent=1 // pred_check
      _
    $region3: #{linear_qnet_forward.1} parent=1 // pred_check_branch
      %12 = sbr.rel (0) target = $region5
    $region4: #{linear_qnet_forward.1} parent=1 // pred_region
      _
    $region5: #{linear_qnet_forward.1} parent=1 // pred_fallthru
      _
    // Predicated region
    $region6: #{linear_qnet_forward.1} parent=1 // pred_check
      _
    $region7: #{linear_qnet_forward.1} parent=1 // pred_check_branch
      %14 = sbr.rel (0) target = $region9
    $region8: #{linear_qnet_forward.1} parent=1 // pred_region
      _
    $region9: #{linear_qnet_forward.1} parent=1 // pred_fallthru
      _
    // Predicated region
    $region10: #{linear_qnet_forward.1} parent=1 // pred_check
      _
    $region11: #{linear_qnet_forward.1} parent=1 // pred_check_branch
      %16 = sbr.rel (0) target = $region13
    $region12: #{linear_qnet_forward.1} parent=1 // pred_region
      _
    $region13: #{linear_qnet_forward.1} parent=1 // pred_fallthru
      _
    // Predicated region
    $region14: #{linear_qnet_forward.1} parent=1 // pred_check
      _
    $region15: #{linear_qnet_forward.1} parent=1 // pred_check_branch
      %18 = sbr.rel (0) target = $region17
    $region16: #{linear_qnet_forward.1} parent=1 // pred_region
      _
    $region17: #{linear_qnet_forward.1} parent=1 // pred_fallthru
      _
    // Predicated region
    $region18: #{linear_qnet_forward.1} parent=1 // pred_check
      _
    $region19: #{linear_qnet_forward.1} parent=1 // pred_check_branch
      %20 = sbr.rel (0) target = $region21
    $region20: #{linear_qnet_forward.1} parent=1 // pred_region
      _
    $region21: #{linear_qnet_forward.1} parent=1 // pred_fallthru
      _
    %v22 = vld [vmem:[%s1] sm:$0xf]
    %v23 = vld [vmem:[%s1 + $0x4] sm:$0xf]
    %v24 = vld [vmem:[%s1 + $0x8] sm:$0xf]
    %v25 = vld [vmem:[%s1 + $0xc] sm:$0xf]
    %v26 = vld [vmem:[%s0] sm:$0xff]
    %v27 = vld [vmem:[%s0 + $0x8] sm:$0xff]
    %v28 = vld [vmem:[%s0 + $0x10] sm:$0xff]
    %v29 = vld [vmem:[%s0 + $0x18] sm:$0xff]
    %v30 = vld [vmem:[%s2] sm:$0xff]
    %v31 = vld [vmem:[%s2 + $0x8] sm:$0xff]
    %v32 = vld [vmem:[%s2 + $0x10] sm:$0xff]
    %v33 = vld [vmem:[%s2 + $0x18] sm:$0xff]
    %35 = vset.pattern.permute.xlu0 0
    %36 = vperm.xlu0 %35, %v30
    %v37 = vpop.permute.xlu0 %36
    %40 = vset.pattern.permute.xlu0 0
    %41 = vperm.xlu0 %40, %v31
    %v42 = vpop.permute.xlu0 %41
    %45 = vset.pattern.permute.xlu0 0
    %46 = vperm.xlu0 %45, %v32
    %v47 = vpop.permute.xlu0 %46
    %50 = vset.pattern.permute.xlu0 0
    %51 = vperm.xlu0 %50, %v33
    %v52 = vpop.permute.xlu0 %51
    %v58 = vunpack.c.l.b16 %v22
    %v59 = vunpack.c.l.b16 %v23
    %v60 = vunpack.c.l.b16 %v24
    %v61 = vunpack.c.l.b16 %v25
    %v62 = vpack.c.b16 %v59, %v58
    %v63 = vpack.c.b16 %v61, %v60
    %v68 = vunpack.c.l.b16 %v26
    %v69 = vunpack.c.h.b16 %v26
    %v70 = vunpack.c.l.b16 %v27
    %v71 = vunpack.c.h.b16 %v27
    %v72 = vunpack.c.l.b16 %v28
    %v73 = vunpack.c.h.b16 %v28
    %v74 = vunpack.c.l.b16 %v29
    %v75 = vunpack.c.h.b16 %v29
    %v76 = vpack.c.b16 %v72, %v68
    %v77 = vpack.c.b16 %v73, %v69
    %v78 = vpack.c.b16 %v74, %v70
    %v79 = vpack.c.b16 %v75, %v71
    %vm84 = vcmask 130048
    %v86 = vsel %vm84, %v62, 0
    %v89 = vsel %vm84, %v63, 0
    %91 = vmatprep.subr.bf16.mxu0 %v77
    %92 = vmatpush1.bf16.msra.mxu0 %v76
    %93 = vmatprep.subr.bf16.mxu0 0
    %94 = vmatpush1.bf16.msra.mxu0 0
    %95 = vmatprep.subr.bf16.mxu0 0
    %96 = vmatpush1.bf16.msra.mxu0 0
    %97 = vmatprep.subr.bf16.mxu0 0
    %98 = vmatpush1.bf16.msra.mxu0 0
    %99 = vmatprep.subr.bf16.mxu0 0
    %100 = vmatpush1.bf16.msra.mxu0 0
    %101 = vmatprep.subr.bf16.mxu0 0
    %102 = vmatpush1.bf16.msra.mxu0 0
    %103 = vmatprep.subr.bf16.mxu0 0
    %104 = vmatpush1.bf16.msra.mxu0 0
    %105 = vmatprep.subr.bf16.mxu0 0
    %106 = vmatpush1.bf16.msra.mxu0 0
    %107 = vmatprep.subr.bf16.mxu0 0
    %108 = vmatpush1.bf16.msra.mxu0 0
    %109 = vmatprep.subr.bf16.mxu0 0
    %110 = vmatpush1.bf16.msra.mxu0 0
    %111 = vmatprep.subr.bf16.mxu0 0
    %112 = vmatpush1.bf16.msra.mxu0 0
    %113 = vmatprep.subr.bf16.mxu0 0
    %114 = vmatpush1.bf16.msra.mxu0 0
    %115 = vmatprep.subr.bf16.mxu0 0
    %116 = vmatpush1.bf16.msra.mxu0 0
    %117 = vmatprep.subr.bf16.mxu0 0
    %118 = vmatpush1.bf16.msra.mxu0 0
    %119 = vmatprep.subr.bf16.mxu0 0
    %120 = vmatpush1.bf16.msra.mxu0 0
    %121 = vmatprep.subr.bf16.mxu0 0
    %122 = vmatpush1.bf16.msra.mxu0 0
    %123 = vmatprep.mubr.bf16.mxu0 0
    %124 = vmatmul.mubr.bf16.gmra.mrb[0].mxu0 %v86
    %v125 = vpop.f32.mrb[0].mxu0
    %v126 = vadd.f32 %v37, %v125
    %v127 = vpop.f32.mrb[0].mxu0
    %v128 = vadd.f32 %v37, %v127
    %v129 = vpop.f32.mrb[0].mxu0
    %v130 = vadd.f32 %v42, %v129
    %v131 = vpop.f32.mrb[0].mxu0
    %v132 = vadd.f32 %v42, %v131
    %133 = vmatprep.mubr.bf16.mxu0 0
    %134 = vmatmul.mubr.bf16.gmra.mrb[0].mxu0 %v89
    %v135 = vpop.f32.mrb[0].mxu0
    %v136 = vadd.f32 %v47, %v135
    %v137 = vpop.f32.mrb[0].mxu0
    %v138 = vadd.f32 %v47, %v137
    %v139 = vpop.f32.mrb[0].mxu0
    %v140 = vadd.f32 %v52, %v139
    %v141 = vpop.f32.mrb[0].mxu0
    %v142 = vadd.f32 %v52, %v141
    %143 = vdwg.mxu0
    %144 = vmatprep.subr.bf16.mxu0 %v79
    %145 = vmatpush1.bf16.msra.mxu0 %v78
    %146 = vmatprep.subr.bf16.mxu0 0
    %147 = vmatpush1.bf16.msra.mxu0 0
    %148 = vmatprep.subr.bf16.mxu0 0
    %149 = vmatpush1.bf16.msra.mxu0 0
    %150 = vmatprep.subr.bf16.mxu0 0
    %151 = vmatpush1.bf16.msra.mxu0 0
    %152 = vmatprep.subr.bf16.mxu0 0
    %153 = vmatpush1.bf16.msra.mxu0 0
    %154 = vmatprep.subr.bf16.mxu0 0
    %155 = vmatpush1.bf16.msra.mxu0 0
    %156 = vmatprep.subr.bf16.mxu0 0
    %157 = vmatpush1.bf16.msra.mxu0 0
    %158 = vmatprep.subr.bf16.mxu0 0
    %159 = vmatpush1.bf16.msra.mxu0 0
    %160 = vmatprep.subr.bf16.mxu0 0
    %161 = vmatpush1.bf16.msra.mxu0 0
    %162 = vmatprep.subr.bf16.mxu0 0
    %163 = vmatpush1.bf16.msra.mxu0 0
    %164 = vmatprep.subr.bf16.mxu0 0
    %165 = vmatpush1.bf16.msra.mxu0 0
    %166 = vmatprep.subr.bf16.mxu0 0
    %167 = vmatpush1.bf16.msra.mxu0 0
    %168 = vmatprep.subr.bf16.mxu0 0
    %169 = vmatpush1.bf16.msra.mxu0 0
    %170 = vmatprep.subr.bf16.mxu0 0
    %171 = vmatpush1.bf16.msra.mxu0 0
    %172 = vmatprep.subr.bf16.mxu0 0
    %173 = vmatpush1.bf16.msra.mxu0 0
    %174 = vmatprep.subr.bf16.mxu0 0
    %175 = vmatpush1.bf16.msra.mxu0 0
    %176 = vmatprep.mubr.bf16.mxu0 0
    %177 = vmatmul.mubr.bf16.gmra.mrb[0].mxu0 %v86
    %v178 = vpop.f32.mrb[0].mxu0
    %v179 = vadd.f32 %v37, %v178
    %v180 = vpop.f32.mrb[0].mxu0
    %v181 = vadd.f32 %v37, %v180
    %v182 = vpop.f32.mrb[0].mxu0
    %v183 = vadd.f32 %v42, %v182
    %v184 = vpop.f32.mrb[0].mxu0
    %v185 = vadd.f32 %v42, %v184
    %186 = vmatprep.mubr.bf16.mxu0 0
    %187 = vmatmul.mubr.bf16.gmra.mrb[0].mxu0 %v89
    %v188 = vpop.f32.mrb[0].mxu0
    %v189 = vadd.f32 %v47, %v188
    %v190 = vpop.f32.mrb[0].mxu0
    %v191 = vadd.f32 %v47, %v190
    %v192 = vpop.f32.mrb[0].mxu0
    %v193 = vadd.f32 %v52, %v192
    %v194 = vpop.f32.mrb[0].mxu0
    %v195 = vadd.f32 %v52, %v194
    %196 = vdwg.mxu0
    %v197 = vmax.f32 %v126, 0.0
    %v198 = vmax.f32 %v128, 0.0
    %v199 = vmax.f32 %v179, 0.0
    %v200 = vmax.f32 %v181, 0.0
    %v201 = vmax.f32 %v130, 0.0
    %v202 = vmax.f32 %v132, 0.0
    %v203 = vmax.f32 %v183, 0.0
    %v204 = vmax.f32 %v185, 0.0
    %v205 = vmax.f32 %v136, 0.0
    %v206 = vmax.f32 %v138, 0.0
    %v207 = vmax.f32 %v189, 0.0
    %v208 = vmax.f32 %v191, 0.0
    %v209 = vmax.f32 %v140, 0.0
    %v210 = vmax.f32 %v142, 0.0
    %v211 = vmax.f32 %v193, 0.0
    %v212 = vmax.f32 %v195, 0.0
    %v213 = vld [vmem:[%s3] sm:$0xf]
    %v214 = vpack.c.bf16 %v201, %v197
    %v215 = vpack.c.bf16 %v202, %v198
    %v216 = vpack.c.bf16 %v203, %v199
    %v217 = vpack.c.bf16 %v204, %v200
    %v218 = vpack.c.bf16 %v209, %v205
    %v219 = vpack.c.bf16 %v210, %v206
    %v220 = vpack.c.bf16 %v211, %v207
    %v221 = vpack.c.bf16 %v212, %v208
    %v222 = vld [vmem:[%s4] sm:$0xff]
    %224 = vset.pattern.permute.xlu0 0
    %225 = vperm.xlu0 %224, %v222
    %v226 = vpop.permute.xlu0 %225
    %vm228 = vcmask 261120
    %v230 = vsel %vm228, %v213, 0
    %232 = vmatprep.subr.bf16.mxu0 %v215
    %233 = vmatpush1.bf16.msra.mxu0 %v214
    %234 = vmatprep.subr.bf16.mxu0 %v219
    %235 = vmatpush1.bf16.msra.mxu0 %v218
    %236 = vmatprep.subr.bf16.mxu0 0
    %237 = vmatpush1.bf16.msra.mxu0 0
    %238 = vmatprep.subr.bf16.mxu0 0
    %239 = vmatpush1.bf16.msra.mxu0 0
    %240 = vmatprep.subr.bf16.mxu0 0
    %241 = vmatpush1.bf16.msra.mxu0 0
    %242 = vmatprep.subr.bf16.mxu0 0
    %243 = vmatpush1.bf16.msra.mxu0 0
    %244 = vmatprep.subr.bf16.mxu0 0
    %245 = vmatpush1.bf16.msra.mxu0 0
    %246 = vmatprep.subr.bf16.mxu0 0
    %247 = vmatpush1.bf16.msra.mxu0 0
    %248 = vmatprep.subr.bf16.mxu0 0
    %249 = vmatpush1.bf16.msra.mxu0 0
    %250 = vmatprep.subr.bf16.mxu0 0
    %251 = vmatpush1.bf16.msra.mxu0 0
    %252 = vmatprep.subr.bf16.mxu0 0
    %253 = vmatpush1.bf16.msra.mxu0 0
    %254 = vmatprep.subr.bf16.mxu0 0
    %255 = vmatpush1.bf16.msra.mxu0 0
    %256 = vmatprep.subr.bf16.mxu0 0
    %257 = vmatpush1.bf16.msra.mxu0 0
    %258 = vmatprep.subr.bf16.mxu0 0
    %259 = vmatpush1.bf16.msra.mxu0 0
    %260 = vmatprep.subr.bf16.mxu0 0
    %261 = vmatpush1.bf16.msra.mxu0 0
    %262 = vmatprep.subr.bf16.mxu0 0
    %263 = vmatpush1.bf16.msra.mxu0 0
    %264 = vmatprep.mubr.bf16.mxu0 0
    %265 = vmatmul.mubr.bf16.gmra.mrb[0].mxu0 %v230
    %v266 = vpop.f32.mrb[0].mxu0
    %v267 = vadd.f32 %v226, %v266
    %v268 = vpop.f32.mrb[0].mxu0
    %v269 = vadd.f32 %v226, %v268
    %v270 = vpop.f32.mrb[0].mxu0
    %v271 = vpop.f32.mrb[0].mxu0
    %272 = vdwg.mxu0
    %273 = vmatprep.subr.bf16.mxu0 %v217
    %274 = vmatpush1.bf16.msra.mxu0 %v216
    %275 = vmatprep.subr.bf16.mxu0 %v221
    %276 = vmatpush1.bf16.msra.mxu0 %v220
    %277 = vmatprep.subr.bf16.mxu0 0
    %278 = vmatpush1.bf16.msra.mxu0 0
    %279 = vmatprep.subr.bf16.mxu0 0
    %280 = vmatpush1.bf16.msra.mxu0 0
    %281 = vmatprep.subr.bf16.mxu0 0
    %282 = vmatpush1.bf16.msra.mxu0 0
    %283 = vmatprep.subr.bf16.mxu0 0
    %284 = vmatpush1.bf16.msra.mxu0 0
    %285 = vmatprep.subr.bf16.mxu0 0
    %286 = vmatpush1.bf16.msra.mxu0 0
    %287 = vmatprep.subr.bf16.mxu0 0
    %288 = vmatpush1.bf16.msra.mxu0 0
    %289 = vmatprep.subr.bf16.mxu0 0
    %290 = vmatpush1.bf16.msra.mxu0 0
    %291 = vmatprep.subr.bf16.mxu0 0
    %292 = vmatpush1.bf16.msra.mxu0 0
    %293 = vmatprep.subr.bf16.mxu0 0
    %294 = vmatpush1.bf16.msra.mxu0 0
    %295 = vmatprep.subr.bf16.mxu0 0
    %296 = vmatpush1.bf16.msra.mxu0 0
    %297 = vmatprep.subr.bf16.mxu0 0
    %298 = vmatpush1.bf16.msra.mxu0 0
    %299 = vmatprep.subr.bf16.mxu0 0
    %300 = vmatpush1.bf16.msra.mxu0 0
    %301 = vmatprep.subr.bf16.mxu0 0
    %302 = vmatpush1.bf16.msra.mxu0 0
    %303 = vmatprep.subr.bf16.mxu0 0
    %304 = vmatpush1.bf16.msra.mxu0 0
    %305 = vmatprep.mubr.bf16.mxu0 0
    %306 = vmatmul.mubr.bf16.gmra.mrb[0].mxu0 %v230
    %v307 = vpop.f32.mrb[0].mxu0
    %v308 = vadd.f32 %v226, %v307
    %v309 = vpop.f32.mrb[0].mxu0
    %v310 = vadd.f32 %v226, %v309
    %v311 = vpop.f32.mrb[0].mxu0
    %v312 = vpop.f32.mrb[0].mxu0
    %313 = vdwg.mxu0
    %314 = vst [vmem:[#allocation2] sm:$0xff] %v267
    %315 = vst [vmem:[#allocation2 + $0x8] sm:$0xff] %v269
    %316 = vst [vmem:[#allocation2 + $0x10] sm:$0xff] %v308
    %317 = vst [vmem:[#allocation2 + $0x18] sm:$0xff] %v310
    // Predicated region
    $region22: #{linear_qnet_forward.1} parent=1 // pred_check
      _
    $region23: #{linear_qnet_forward.1} parent=1 // pred_check_branch
      %319 = sbr.rel (0) target = $region25
    $region24: #{linear_qnet_forward.1} parent=1 // pred_region
      %s321 = ssub.s32 512, 512
      %322 = vsyncadd [#allocation3], %s321
      %s324 = sshll.u32 [#allocation2], 4
      %s325 = int_to_ptr.vmem [resolvable:$true] %s324
      %327 = dma.vmem_to_hbm [thread:$0]  %s325, 512, %s5, [#allocation3]
    $region25: #{linear_qnet_forward.1} parent=1 // pred_fallthru
      _
    // Predicated region
    $region26: #{linear_qnet_forward.1} parent=1 // pred_check
      _
    $region27: #{linear_qnet_forward.1} parent=1 // pred_check_branch
      %329 = sbr.rel (0) target = $region29
    $region28: #{linear_qnet_forward.1} parent=1 // pred_region
      %330 = dma.done [#allocation3], 512
    $region29: #{linear_qnet_forward.1} parent=1 // pred_fallthru
      _
    %331 = vsyncpa [#allocation3], 1

</llo_original>
